<compile_context>
chip_gen: v7x
topology: tpu7x:2x2x1
jax: 0.10.0
libtpu: 0.0.40
codegen_flags: <defaults>
</compile_context>

<pallas_src>
import jax
import jax.numpy as jnp
from jax import lax
from jax.experimental import pallas as pl
from jax.experimental.pallas import tpu as pltpu


def _round_up(x, m):
    return ((x + m - 1) // m) * m


def head_kernel(x_ref, w1_ref, b1_ref, w2_ref, b2_ref, o_ref):
    # Cast the x tile to bf16 in VMEM (native MXU input dtype) — no extra HBM pass.
    x = x_ref[...].astype(jnp.bfloat16)

    # Linear 1: (TB, L)bf16 @ (L, P)bf16 -> f32 accumulation on the MXU, + (1, P)f32
    h = jnp.dot(x, w1_ref[...], preferred_element_type=jnp.float32)
    h = h + b1_ref[...]

    # InstanceNorm1d on a 2-D tensor == per-row normalization over the feature dim
    # (biased variance, eps=1e-5, no affine). Two-pass statistics for numerics:
    # the kernel is HBM-bound, so the extra reduction is free filler.
    mean = jnp.mean(h, axis=-1, keepdims=True)
    c = h - mean
    var = jnp.mean(c * c, axis=-1, keepdims=True)
    h = c * lax.rsqrt(var + 1e-5)

    # ReLU
    h = jnp.maximum(h, 0.0)

    # Linear 2: (TB, P)bf16 @ (P, P)bf16 -> f32 accumulation, + (1, P)f32
    out = jnp.dot(h.astype(w2_ref.dtype), w2_ref[...],
                  preferred_element_type=jnp.float32)
    out = out + b2_ref[...]
    o_ref[...] = out.astype(o_ref.dtype)


def trainable_head_pallas(x, w1, b1, w2, b2, *, block_b=1024, out_dtype=jnp.float32):
    """x: (B, L); w1: (L, P); b1: (P,); w2: (P, P); b2: (P,) -> (B, P) out_dtype.

    x streams in its native dtype (no wrapper-side cast/pad); matmul inputs are
    bf16, accumulation and normalization are f32.
    """
    B, L = x.shape
    P = w1.shape[1]

    # Weights/biases are small and DMA'd once per call (constant index_map);
    # casting them to bf16 here is a one-off, not a per-step HBM pass.
    w1_bf = w1.astype(jnp.bfloat16)
    w2_bf = w2.astype(jnp.bfloat16)
    b1_2d = b1.reshape(1, P).astype(jnp.float32)
    b2_2d = b2.reshape(1, P).astype(jnp.float32)

    x_bytes = jnp.dtype(x.dtype).itemsize
    out_bytes = jnp.dtype(out_dtype).itemsize

    # --- batch tile selection ---------------------------------------------
    #  * multiple of 16 (bf16 sublane packing; also valid for f32)
    #  * >= 2 grid steps whenever B allows -> dual-TC sharding on v7x
    #  * x/out double-buffers + resident weights capped at ~40 MiB so the
    #    working set fits v7x's 64 MiB VMEM (and v5e once the limit is raised)
    tb = min(block_b, _round_up(max(-(-B // 2), 1), 16))
    tb = max(_round_up(tb, 16), 16)
    weights_vmem = 2 * (L * P + P * P) * 2 + 2 * 2 * P * 4   # double-buffered bf16 + biases
    dbuf_budget = (40 << 20) - weights_vmem
    while tb > 16 and 2 * tb * (L * x_bytes + P * out_bytes) > dbuf_budget:
        tb = max(_round_up(tb // 2, 16), 16)

    grid = (pl.cdiv(B, tb),)   # ragged last block: Pallas masks OOB writes

    needed = 2 * tb * (L * x_bytes + P * out_bytes) + weights_vmem
    vmem_limit = int(min(48 << 20, max(32 << 20, needed + (4 << 20))))

    cost = pl.CostEstimate(
        flops=2 * B * L * P + 2 * B * P * P,
        transcendentals=0,
        bytes_accessed=(B * L * x_bytes + w1_bf.size * 2 + w2_bf.size * 2
                        + b1_2d.size * 4 + b2_2d.size * 4 + B * P * out_bytes),
    )

    return pl.pallas_call(
        head_kernel,
        out_shape=jax.ShapeDtypeStruct((B, P), out_dtype),
        grid_spec=pltpu.PrefetchScalarGridSpec(
            num_scalar_prefetch=0,
            grid=grid,
            in_specs=[
                # x: blocked along batch -> double-buffered / pipelined DMA.
                pl.BlockSpec((tb, L), lambda i: (i, 0)),
                # weights / biases: constant block index -> DMA'd once, VMEM-resident.
                pl.BlockSpec((L, P), lambda i: (0, 0)),
                pl.BlockSpec((1, P), lambda i: (0, 0)),
                pl.BlockSpec((P, P), lambda i: (0, 0)),
                pl.BlockSpec((1, P), lambda i: (0, 0)),
            ],
            out_specs=pl.BlockSpec((tb, P), lambda i: (i, 0)),
        ),
        compiler_params=pltpu.CompilerParams(
            # Rows are independent -> shard grid steps across TCs on v7x.
            dimension_semantics=("parallel",),
            vmem_limit_bytes=vmem_limit,
        ),
        cost_estimate=cost,
    )(x, w1_bf, b1_2d, w2_bf, b2_2d)


def trainable_head_ref(x, w1, b1, w2, b2):
    h = x @ w1 + b1
    mean = jnp.mean(h, axis=-1, keepdims=True)
    var = jnp.mean((h - mean) ** 2, axis=-1, keepdims=True)
    h = (h - mean) / jnp.sqrt(var + 1e-5)
    h = jnp.maximum(h, 0.0)
    return h @ w2 + b2


if __name__ == "__main__":
    # Small shapes consistent with the module: batch of frozen LLM encodings
    # (latent_size analogous to Llama's 3072, scaled down), prototype_dim=128.
    B = 40           # batch (deliberately not a tile multiple -> exercises the masked partial block)
    LATENT = 512     # latent_size (scaled-down stand-in for 3072/4096)
    PROTO = 128      # prototype_dim (module default)

    key = jax.random.PRNGKey(0)
    k_x, k_w1, k_b1, k_w2, k_b2 = jax.random.split(key, 5)

    # Deterministic parameter init (uniform, Linear-style fan-in scaling).
    lim1 = 1.0 / (LATENT ** 0.5)
    lim2 = 1.0 / (PROTO ** 0.5)
    x = jax.random.normal(k_x, (B, LATENT), dtype=jnp.float32)
    w1 = jax.random.uniform(k_w1, (LATENT, PROTO), jnp.float32, -lim1, lim1)
    b1 = jax.random.uniform(k_b1, (PROTO,), jnp.float32, -lim1, lim1)
    w2 = jax.random.uniform(k_w2, (PROTO, PROTO), jnp.float32, -lim2, lim2)
    b2 = jax.random.uniform(k_b2, (PROTO,), jnp.float32, -lim2, lim2)

    ref = trainable_head_ref(x, w1, b1, w2, b2)

    # Small tile -> grid of 3 with a masked partial last block (pipelining path).
    out_tiled = jax.block_until_ready(
        trainable_head_pallas(x, w1, b1, w2, b2, block_b=16))
    # Default sizing: tb chosen so grid >= 2 (dual-TC on v7x) with a masked tail.
    out_default = jax.block_until_ready(
        trainable_head_pallas(x, w1, b1, w2, b2))

    assert out_tiled.shape == (B, PROTO)
    assert out_default.shape == (B, PROTO)
    # bf16 matmul inputs / f32 accumulation -> bf16-level tolerance vs the f32 reference.
    assert jnp.allclose(out_tiled, ref, atol=2e-2, rtol=2e-2), "tiled mismatch vs reference"
    assert jnp.allclose(out_default, ref, atol=2e-2, rtol=2e-2), "default mismatch vs reference"
    assert jnp.allclose(out_tiled, out_default, atol=1e-5, rtol=1e-5), "tiling changed results"

    print("KERNEL_OK")
</pallas_src>

<mosaic_0001>
module attributes {stable_mosaic.version = 11 : i64} {
  func.func @head_kernel(%arg0: i32, %arg1: memref<16x512xf32, #tpu.memory_space<vmem>>, %arg2: memref<512x128xbf16, #tpu.memory_space<vmem>>, %arg3: memref<1x128xf32, #tpu.memory_space<vmem>>, %arg4: memref<128x128xbf16, #tpu.memory_space<vmem>>, %arg5: memref<1x128xf32, #tpu.memory_space<vmem>>, %arg6: memref<16x128xf32, #tpu.memory_space<vmem>>) attributes {dimension_semantics = [#tpu.dimension_semantics<parallel>], iteration_bounds = array<i64: 3>, scalar_prefetch = 0 : i64, scratch_operands = 0 : i64, tpu.core_type = #tpu.core_type<tc>, window_params = [{transform_indices = @transform_0, window_bounds = array<i64: 16, 512>}, {pipeline_mode = #tpu.pipeline_mode<synchronous>, transform_indices = @transform_1, window_bounds = array<i64: 512, 128>}, {pipeline_mode = #tpu.pipeline_mode<synchronous>, transform_indices = @transform_2, window_bounds = array<i64: 1, 128>}, {pipeline_mode = #tpu.pipeline_mode<synchronous>, transform_indices = @transform_3, window_bounds = array<i64: 128, 128>}, {pipeline_mode = #tpu.pipeline_mode<synchronous>, transform_indices = @transform_4, window_bounds = array<i64: 1, 128>}, {transform_indices = @transform_5, window_bounds = array<i64: 16, 128>}]} {
    %c0 = arith.constant 0 : index
    %c0_0 = arith.constant 0 : index
    %0 = vector.load %arg1[%c0, %c0_0] : memref<16x512xf32, #tpu.memory_space<vmem>>, vector<16x512xf32>
    %1 = arith.truncf %0 : vector<16x512xf32> to vector<16x512xbf16>
    %c0_1 = arith.constant 0 : index
    %c0_2 = arith.constant 0 : index
    %2 = vector.load %arg2[%c0_1, %c0_2] : memref<512x128xbf16, #tpu.memory_space<vmem>>, vector<512x128xbf16>
    %cst = arith.constant dense<0.000000e+00> : vector<16x128xf32>
    %3 = tpu.matmul %1, %2, %cst {dimension_numbers = #tpu.dot_dimension_numbers<[1], [0], [0], [1], [0, 0, 1, 1], [], []>} : vector<16x512xbf16>, vector<512x128xbf16>, vector<16x128xf32> -> vector<16x128xf32>
    %c0_3 = arith.constant 0 : index
    %c0_4 = arith.constant 0 : index
    %4 = vector.load %arg3[%c0_3, %c0_4] : memref<1x128xf32, #tpu.memory_space<vmem>>, vector<1x128xf32>
    %5 = vector.broadcast %4 : vector<1x128xf32> to vector<16x128xf32>
    %6 = arith.addf %3, %5 : vector<16x128xf32>
    %cst_5 = arith.constant dense<0.000000e+00> : vector<16xf32>
    %7 = vector.multi_reduction <add>, %6, %cst_5 [1] : vector<16x128xf32> to vector<16xf32>
    %8 = vector.shape_cast %7 : vector<16xf32> to vector<16x1xf32>
    %cst_6 = arith.constant 1.280000e+02 : f32
    %9 = vector.broadcast %cst_6 : f32 to vector<16x1xf32>
    %10 = arith.divf %8, %9 : vector<16x1xf32>
    %11 = vector.broadcast %10 : vector<16x1xf32> to vector<16x128xf32>
    %12 = arith.subf %6, %11 : vector<16x128xf32>
    %13 = arith.mulf %12, %12 : vector<16x128xf32>
    %cst_7 = arith.constant dense<0.000000e+00> : vector<16xf32>
    %14 = vector.multi_reduction <add>, %13, %cst_7 [1] : vector<16x128xf32> to vector<16xf32>
    %15 = vector.shape_cast %14 : vector<16xf32> to vector<16x1xf32>
    %cst_8 = arith.constant 1.280000e+02 : f32
    %16 = vector.broadcast %cst_8 : f32 to vector<16x1xf32>
    %17 = arith.divf %15, %16 : vector<16x1xf32>
    %cst_9 = arith.constant 9.99999974E-6 : f32
    %18 = vector.broadcast %cst_9 : f32 to vector<16x1xf32>
    %19 = arith.addf %17, %18 : vector<16x1xf32>
    %20 = math.rsqrt %19 : vector<16x1xf32>
    %21 = vector.broadcast %20 : vector<16x1xf32> to vector<16x128xf32>
    %22 = arith.mulf %12, %21 : vector<16x128xf32>
    %cst_10 = arith.constant 0.000000e+00 : f32
    %23 = vector.broadcast %cst_10 : f32 to vector<16x128xf32>
    %24 = arith.maximumf %22, %23 : vector<16x128xf32>
    %25 = arith.truncf %24 : vector<16x128xf32> to vector<16x128xbf16>
    %c0_11 = arith.constant 0 : index
    %c0_12 = arith.constant 0 : index
    %26 = vector.load %arg4[%c0_11, %c0_12] : memref<128x128xbf16, #tpu.memory_space<vmem>>, vector<128x128xbf16>
    %cst_13 = arith.constant dense<0.000000e+00> : vector<16x128xf32>
    %27 = tpu.matmul %25, %26, %cst_13 {dimension_numbers = #tpu.dot_dimension_numbers<[1], [0], [0], [1], [0, 0, 1, 1], [], []>} : vector<16x128xbf16>, vector<128x128xbf16>, vector<16x128xf32> -> vector<16x128xf32>
    %c0_14 = arith.constant 0 : index
    %c0_15 = arith.constant 0 : index
    %28 = vector.load %arg5[%c0_14, %c0_15] : memref<1x128xf32, #tpu.memory_space<vmem>>, vector<1x128xf32>
    %29 = vector.broadcast %28 : vector<1x128xf32> to vector<16x128xf32>
    %30 = arith.addf %27, %29 : vector<16x128xf32>
    %c0_16 = arith.constant 0 : index
    %c0_17 = arith.constant 0 : index
    %31 = vector.load %arg6[%c0_16, %c0_17] : memref<16x128xf32, #tpu.memory_space<vmem>>, vector<16x128xf32>
    tpu.vector_store %arg6[%c0_16, %c0_17], %30 {strides = array<i32>} : memref<16x128xf32, #tpu.memory_space<vmem>>, vector<16x128xf32>,
    return
  }
  func.func @transform_0(%arg0: i32) -> (i32, i32) {
    %c0_i32 = arith.constant 0 : i32
    %c0_i32_0 = arith.constant 0 : i32
    return %arg0, %c0_i32 : i32, i32
  }
  func.func @transform_1(%arg0: i32) -> (i32, i32) {
    %c0_i32 = arith.constant 0 : i32
    %c0_i32_0 = arith.constant 0 : i32
    %c0_i32_1 = arith.constant 0 : i32
    return %c0_i32, %c0_i32_0 : i32, i32
  }
  func.func @transform_2(%arg0: i32) -> (i32, i32) {
    %c0_i32 = arith.constant 0 : i32
    %c0_i32_0 = arith.constant 0 : i32
    %c0_i32_1 = arith.constant 0 : i32
    return %c0_i32, %c0_i32_0 : i32, i32
  }
  func.func @transform_3(%arg0: i32) -> (i32, i32) {
    %c0_i32 = arith.constant 0 : i32
    %c0_i32_0 = arith.constant 0 : i32
    %c0_i32_1 = arith.constant 0 : i32
    return %c0_i32, %c0_i32_0 : i32, i32
  }
  func.func @transform_4(%arg0: i32) -> (i32, i32) {
    %c0_i32 = arith.constant 0 : i32
    %c0_i32_0 = arith.constant 0 : i32
    %c0_i32_1 = arith.constant 0 : i32
    return %c0_i32, %c0_i32_0 : i32, i32
  }
  func.func @transform_5(%arg0: i32) -> (i32, i32) {
    %c0_i32 = arith.constant 0 : i32
    %c0_i32_0 = arith.constant 0 : i32
    return %arg0, %c0_i32 : i32, i32
  }
}

</mosaic_0001>

<llo_original>
// kernel: tpu_custom_call.1
$region0: #{tpu_custom_call.1}
  #allocation0 [shape = 'u32[]', space=smem, size = 0x4, offset = 0x4, fixed_abs, tag = 'smem constant byte address 0x4 - core index']
  #allocation1 [shape = 'u32[144,128]{1,0:T(1,128)}', space=vmem, size = 0x12000, scoped, tag = 'internal scratch']
  %s0 = inlined_call_operand.hbm [shape: f32[40,512], index: 0, kind: input, shape index: {}]
  %s1 = inlined_call_operand.hbm [shape: bf16[512,128], index: 1, kind: input, shape index: {}]
  %s2 = inlined_call_operand.vmem [shape: f32[1,128], index: 2, kind: input, shape index: {}]
  %s3 = inlined_call_operand.hbm [shape: bf16[128,128], index: 3, kind: input, shape index: {}]
  %s4 = inlined_call_operand.vmem [shape: f32[1,128], index: 4, kind: input, shape index: {}]
  %s5 = inlined_call_operand.hbm [shape: f32[40,128], index: 5, kind: output, shape index: {}]
  %s6 = sld [smem:[#allocation0]]
  $region65: #{tpu_custom_call.1} parent=0
    _
  %s8 = ssub.s32 1, %s6
  %s9 = scalar_select 0, %s8, %s6
  $region1: #{tpu_custom_call.1} parent=0
    #allocation2 [shape = 'u8[65536]{0}', space=vmem, size = 0x10000, scoped, tag = 'input window, operand 0']
    #allocation3 [shape = 's32[2]{0}', space=sflag, size = 0x8, scoped, tag = 'scoped memory for tpu_custom_call.1']
    #allocation4 [shape = 's32[2]{0}', space=sflag, size = 0x8, scoped, tag = 'scoped memory for tpu_custom_call.1']
    #allocation5 [shape = 'u8[131072]{0}', space=vmem, size = 0x20000, scoped, tag = 'input window, operand 1, single buffered']
    #allocation6 [shape = 's32[1]{0}', space=sflag, size = 0x4, scoped, tag = 'scoped memory for tpu_custom_call.1']
    #allocation7 [shape = 'u8[32768]{0}', space=vmem, size = 0x8000, scoped, tag = 'input window, operand 3, single buffered']
    #allocation8 [shape = 'u8[16384]{0}', space=vmem, size = 0x4000, scoped, tag = 'output window, operand 0']
    %10 = vsyncpa [#allocation3], 0
    %s11 = scalar_lea.sflag [#allocation3], 1
    %12 = vsyncpa %s11, 0
    %13 = vsyncpa [#allocation6], 0
    %14 = vsyncpa [#allocation4], 0
    %s15 = scalar_lea.sflag [#allocation4], 1
    %16 = vsyncpa %s15, 0
    loop: start=0, step=1, limit=5
    $region2: #{tpu_custom_call.1} parent=1 // loop_pre_header
      _
    $region3: #{tpu_custom_call.1} parent=1 // loop_header
      %s18 = sphi 0, %s22
      %p19 = scmp.ge.s32.totalorder %s18, 5
      %s28 = sphi 0, %s30
      %s31 = sphi 0, %s28
      %s32 = sphi 0, %s31
      %s48 = sphi 0, %s32
      %s52 = sphi 0, %s52
      %s54 = sphi 0, %s52
      %s55 = sphi 0, %s54
      %s69 = sphi 0, %s55
      %s73 = sphi 0, %s73
      %s75 = sphi 0, %s73
      %s76 = sphi 0, %s75
      %s90 = sphi 0, %s76
      %s94 = sphi 0, %s94
      %s96 = sphi 0, %s94
      %s97 = sphi 0, %s96
      %s111 = sphi 0, %s97
      %s115 = sphi 0, %s115
      %s117 = sphi 0, %s115
      %s118 = sphi 0, %s117
      %s132 = sphi 0, %s118
      %s138 = sphi 0, %s140
      %s141 = sphi 0, %s138
      %s142 = sphi 0, %s141
      %s158 = sphi 0, %s142
    $region4: #{tpu_custom_call.1} parent=1 // loop_header_branch
      %21 = sbr.rel (%p19) target = $region8
    $region5: #{tpu_custom_call.1} parent=1 // loop_body
      %s23 = ssub.s32 %s18, 1
      %s24 = ssub.s32 %s18, 2
      %s25 = sadd.s32 %s18, 1
      %s26 = ssub.s32 %s18, %s25
      %p27 = scmp.eq.s32.totalorder %s26, 0
      %s29 = sadd.s32 %s28, 1
      %s30 = scalar_select %p27, %s28, %s29
      %p33 = pneg %p27
      %p34 = scmp.eq.s32.totalorder %s18, 2
      %p35 = por %p33, %p34
      %p36 = scmp.ne.s32.totalorder %s28, %s31
      %p37 = scmp.eq.s32.totalorder %s18, 0
      %p38 = por %p36, %p37
      %p39 = scmp.ne.s32.totalorder %s28, %s31
      %p40 = scmp.eq.s32.totalorder %s23, 2
      %p41 = por %p39, %p40
      %p42 = scmp.ne.s32.totalorder %s31, %s32
      %p43 = scmp.eq.s32.totalorder %s23, 0
      %p44 = por %p42, %p43
      %p45 = scmp.ne.s32.totalorder %s31, %s32
      %p46 = scmp.eq.s32.totalorder %s24, 2
      %p47 = por %p45, %p46
      %p49 = scmp.ne.s32.totalorder %s32, %s48
      %p50 = scmp.eq.s32.totalorder %s24, 0
      %p51 = por %p49, %p50
      %s53 = sadd.s32 %s52, 1
      %p56 = scmp.eq.s32.totalorder %s18, 2
      %p57 = scmp.ne.s32.totalorder %s52, %s54
      %p58 = scmp.eq.s32.totalorder %s18, 0
      %p59 = por %p57, %p58
      %p60 = scmp.ne.s32.totalorder %s52, %s54
      %p61 = scmp.eq.s32.totalorder %s23, 2
      %p62 = por %p60, %p61
      %p63 = scmp.ne.s32.totalorder %s54, %s55
      %p64 = scmp.eq.s32.totalorder %s23, 0
      %p65 = por %p63, %p64
      %p66 = scmp.ne.s32.totalorder %s54, %s55
      %p67 = scmp.eq.s32.totalorder %s24, 2
      %p68 = por %p66, %p67
      %p70 = scmp.ne.s32.totalorder %s55, %s69
      %p71 = scmp.eq.s32.totalorder %s24, 0
      %p72 = por %p70, %p71
      %s74 = sadd.s32 %s73, 1
      %p77 = scmp.eq.s32.totalorder %s18, 2
      %p78 = scmp.ne.s32.totalorder %s73, %s75
      %p79 = scmp.eq.s32.totalorder %s18, 0
      %p80 = por %p78, %p79
      %p81 = scmp.ne.s32.totalorder %s73, %s75
      %p82 = scmp.eq.s32.totalorder %s23, 2
      %p83 = por %p81, %p82
      %p84 = scmp.ne.s32.totalorder %s75, %s76
      %p85 = scmp.eq.s32.totalorder %s23, 0
      %p86 = por %p84, %p85
      %p87 = scmp.ne.s32.totalorder %s75, %s76
      %p88 = scmp.eq.s32.totalorder %s24, 2
      %p89 = por %p87, %p88
      %p91 = scmp.ne.s32.totalorder %s76, %s90
      %p92 = scmp.eq.s32.totalorder %s24, 0
      %p93 = por %p91, %p92
      %s95 = sadd.s32 %s94, 1
      %p98 = scmp.eq.s32.totalorder %s18, 2
      %p99 = scmp.ne.s32.totalorder %s94, %s96
      %p100 = scmp.eq.s32.totalorder %s18, 0
      %p101 = por %p99, %p100
      %p102 = scmp.ne.s32.totalorder %s94, %s96
      %p103 = scmp.eq.s32.totalorder %s23, 2
      %p104 = por %p102, %p103
      %p105 = scmp.ne.s32.totalorder %s96, %s97
      %p106 = scmp.eq.s32.totalorder %s23, 0
      %p107 = por %p105, %p106
      %p108 = scmp.ne.s32.totalorder %s96, %s97
      %p109 = scmp.eq.s32.totalorder %s24, 2
      %p110 = por %p108, %p109
      %p112 = scmp.ne.s32.totalorder %s97, %s111
      %p113 = scmp.eq.s32.totalorder %s24, 0
      %p114 = por %p112, %p113
      %s116 = sadd.s32 %s115, 1
      %p119 = scmp.eq.s32.totalorder %s18, 2
      %p120 = scmp.ne.s32.totalorder %s115, %s117
      %p121 = scmp.eq.s32.totalorder %s18, 0
      %p122 = por %p120, %p121
      %p123 = scmp.ne.s32.totalorder %s115, %s117
      %p124 = scmp.eq.s32.totalorder %s23, 2
      %p125 = por %p123, %p124
      %p126 = scmp.ne.s32.totalorder %s117, %s118
      %p127 = scmp.eq.s32.totalorder %s23, 0
      %p128 = por %p126, %p127
      %p129 = scmp.ne.s32.totalorder %s117, %s118
      %p130 = scmp.eq.s32.totalorder %s24, 2
      %p131 = por %p129, %p130
      %p133 = scmp.ne.s32.totalorder %s118, %s132
      %p134 = scmp.eq.s32.totalorder %s24, 0
      %p135 = por %p133, %p134
      %s136 = ssub.s32 %s18, %s25
      %p137 = scmp.eq.s32.totalorder %s136, 0
      %s139 = sadd.s32 %s138, 1
      %s140 = scalar_select %p137, %s138, %s139
      %p143 = pneg %p137
      %p144 = scmp.eq.s32.totalorder %s18, 2
      %p145 = por %p143, %p144
      %p146 = scmp.ne.s32.totalorder %s138, %s141
      %p147 = scmp.eq.s32.totalorder %s18, 0
      %p148 = por %p146, %p147
      %p149 = scmp.ne.s32.totalorder %s138, %s141
      %p150 = scmp.eq.s32.totalorder %s23, 2
      %p151 = por %p149, %p150
      %p152 = scmp.ne.s32.totalorder %s141, %s142
      %p153 = scmp.eq.s32.totalorder %s23, 0
      %p154 = por %p152, %p153
      %p155 = scmp.ne.s32.totalorder %s141, %s142
      %p156 = scmp.eq.s32.totalorder %s24, 2
      %p157 = por %p155, %p156
      %p159 = scmp.ne.s32.totalorder %s142, %s158
      %p160 = scmp.eq.s32.totalorder %s24, 0
      %p161 = por %p159, %p160
      %p162 = scmp.le.s32.totalorder 1, %s18
      %p163 = scmp.lt.s32.totalorder %s18, 4
      %p164 = pnand %p162, %p163
      %p165 = pneg %p164
      // Predicated region
      $region9: #{tpu_custom_call.1} parent=5 // pred_check
        _
      $region10: #{tpu_custom_call.1} parent=5 // pred_check_branch
        %167 = sbr.rel (%p164) target = $region12
      $region11: #{tpu_custom_call.1} parent=5 // pred_region
        %s168 = ssub.s32 %s18, 1
        // Predicated region
        $region13: #{tpu_custom_call.1} parent=11 // pred_check
          %p169 = pneg %p65
        $region14: #{tpu_custom_call.1} parent=11 // pred_check_branch
          %171 = sbr.rel (%p169) target = $region16
        $region15: #{tpu_custom_call.1} parent=11 // pred_region
          %s173 = ssub.s32 4096, 4096
          %174 = vsyncadd [#allocation6], %s173
          %s175 = sshll.u32 [#allocation5], 4
          %s176 = int_to_ptr.vmem [resolvable:$true] %s175
          %181 = dma.hbm_to_vmem [thread:$0]  %s1, 4096, %s176, [#allocation6], 64, 64, 4
        $region16: #{tpu_custom_call.1} parent=11 // pred_fallthru
          _
        // Predicated region
        $region17: #{tpu_custom_call.1} parent=11 // pred_check
          %p182 = pneg %p86
        $region18: #{tpu_custom_call.1} parent=11 // pred_check_branch
          %184 = sbr.rel (%p182) target = $region20
        $region19: #{tpu_custom_call.1} parent=11 // pred_region
          _
        $region20: #{tpu_custom_call.1} parent=11 // pred_fallthru
          _
        // Predicated region
        $region21: #{tpu_custom_call.1} parent=11 // pred_check
          %p185 = pneg %p107
        $region22: #{tpu_custom_call.1} parent=11 // pred_check_branch
          %187 = sbr.rel (%p185) target = $region24
        $region23: #{tpu_custom_call.1} parent=11 // pred_region
          %s189 = ssub.s32 1024, 1024
          %190 = vsyncadd [#allocation6], %s189
          %s191 = sshll.u32 [#allocation7], 4
          %s192 = int_to_ptr.vmem [resolvable:$true] %s191
          %197 = dma.hbm_to_vmem [thread:$0]  %s3, 1024, %s192, [#allocation6], 64, 64, 4
        $region24: #{tpu_custom_call.1} parent=11 // pred_fallthru
          _
        // Predicated region
        $region25: #{tpu_custom_call.1} parent=11 // pred_check
          %p198 = pneg %p128
        $region26: #{tpu_custom_call.1} parent=11 // pred_check_branch
          %200 = sbr.rel (%p198) target = $region28
        $region27: #{tpu_custom_call.1} parent=11 // pred_region
          _
        $region28: #{tpu_custom_call.1} parent=11 // pred_fallthru
          _
      $region12: #{tpu_custom_call.1} parent=5 // pred_fallthru
        _
      %p201 = scmp.lt.s32.totalorder %s18, 3
      // Predicated region
      $region29: #{tpu_custom_call.1} parent=5 // pred_check
        %p202 = pneg %p201
      $region30: #{tpu_custom_call.1} parent=5 // pred_check_branch
        %204 = sbr.rel (%p202) target = $region32
      $region31: #{tpu_custom_call.1} parent=5 // pred_region
        // Predicated region
        $region33: #{tpu_custom_call.1} parent=31 // pred_check
          %p205 = pneg %p38
        $region34: #{tpu_custom_call.1} parent=31 // pred_check_branch
          %207 = sbr.rel (%p205) target = $region36
        $region35: #{tpu_custom_call.1} parent=31 // pred_region
          %s208 = sand.u32 %s28, 1
          %s209 = scalar_lea.sflag [#allocation3], %s208
          %s210 = sand.u32 %s28, 1
          %s211 = smul.addr %s210, 64
          %s212 = scalar_lea.vmem [#allocation2], %s211
          %s213 = smul.u32 2, %s18
          %s214 = ssub.s32 5, %s213
          %p215 = scmp.lt.s32.totalorder %s214, 2
          %s216 = scalar_select %p215, %s214, 2
          %s217 = smul.u32 128, %s216
          %s218 = smul.u32 %s217, 4
          %s220 = ssub.s32 1024, %s218
          %221 = vsyncadd %s209, %s220
          %p222 = scmp.ne.s32.totalorder 0, %s218
          %s223 = smul.addr %s213, 4
          %s224 = smul.addr %s223, 128
          %s225 = scalar_lea.hbm %s0, %s224
          %s226 = smul.u32 32, %s216
          %s227 = sshll.u32 %s212, 4
          %s228 = int_to_ptr.vmem [resolvable:$true] %s227
          %s229 = sshll.u32 %s226, 4
          %233 = dma.hbm_to_vmem [thread:$0]  (%p222), %s225, %s229, %s228, %s209, 512, 512, 32
        $region36: #{tpu_custom_call.1} parent=31 // pred_fallthru
          _
      $region32: #{tpu_custom_call.1} parent=5 // pred_fallthru
        _
      %p234 = scmp.le.s32.totalorder 1, %s18
      %p235 = scmp.lt.s32.totalorder %s18, 4
      %p236 = pnand %p234, %p235
      %p237 = pneg %p236
      // Predicated region
      $region37: #{tpu_custom_call.1} parent=5 // pred_check
        _
      $region38: #{tpu_custom_call.1} parent=5 // pred_check_branch
        %239 = sbr.rel (%p236) target = $region40
      $region39: #{tpu_custom_call.1} parent=5 // pred_region
        %s240 = ssub.s32 %s18, 1
        %s241 = sand.u32 %s31, 1
        %s242 = scalar_lea.sflag [#allocation3], %s241
        %s243 = sand.u32 %s31, 1
        %s244 = smul.addr %s243, 64
        %s245 = scalar_lea.vmem [#allocation2], %s244
        // Predicated region
        $region41: #{tpu_custom_call.1} parent=39 // pred_check
          %p246 = pneg %p44
        $region42: #{tpu_custom_call.1} parent=39 // pred_check_branch
          %248 = sbr.rel (%p246) target = $region44
        $region43: #{tpu_custom_call.1} parent=39 // pred_region
          %249 = dma.done %s242, 1024
        $region44: #{tpu_custom_call.1} parent=39 // pred_fallthru
          _
        // Predicated region
        $region45: #{tpu_custom_call.1} parent=39 // pred_check
          %p250 = pneg %p65
        $region46: #{tpu_custom_call.1} parent=39 // pred_check_branch
          %252 = sbr.rel (%p250) target = $region48
        $region47: #{tpu_custom_call.1} parent=39 // pred_region
          %253 = dma.done [#allocation6], 4096
        $region48: #{tpu_custom_call.1} parent=39 // pred_fallthru
          _
        // Predicated region
        $region49: #{tpu_custom_call.1} parent=39 // pred_check
          %p254 = pneg %p107
        $region50: #{tpu_custom_call.1} parent=39 // pred_check_branch
          %256 = sbr.rel (%p254) target = $region52
        $region51: #{tpu_custom_call.1} parent=39 // pred_region
          %257 = dma.done [#allocation6], 1024
        $region52: #{tpu_custom_call.1} parent=39 // pred_fallthru
          _
        %s258 = sand.u32 %s31, 1
        %s259 = scalar_lea.sflag [#allocation3], %s258
        %s260 = sand.u32 %s31, 1
        %s261 = smul.addr %s260, 64
        %s262 = scalar_lea.vmem [#allocation2], %s261
        %p263 = pneg %p44
        %p264 = pneg %p41
        %p265 = pneg %p65
        %p266 = pneg %p62
        %p267 = pneg %p86
        %p268 = pneg %p83
        %p269 = pneg %p107
        %p270 = pneg %p104
        %p271 = pneg %p128
        %p272 = pneg %p125
        %p273 = pneg %p154
        %p274 = pneg %p151
        %s275 = sand.u32 %s141, 1
        %s276 = scalar_lea.sflag [#allocation4], %s275
        %s277 = sand.u32 %s141, 1
        %s278 = smul.addr %s277, 16
        %s279 = scalar_lea.vmem [#allocation8], %s278
        %s280 = smul.u32 2, %s23
        %s281 = ssub.s32 5, %s280
        %p282 = scmp.lt.s32.totalorder %s281, 2
        %s283 = scalar_select %p282, %s281, 2
        %s284 = smul.u32 128, %s283
        %s285 = smul.u32 %s284, 4
        %s286 = smul.u32 2, %s23
        %s287 = ssub.s32 5, %s286
        %p288 = scmp.lt.s32.totalorder %s287, 2
        %s289 = scalar_select %p288, %s287, 2
        %s290 = smul.u32 128, %s289
        %v292 = vld [vmem:[%s245] sm:$0xff]
        %v293 = vld [vmem:[%s245 + $0x8] sm:$0xff]
        %v294 = vld [vmem:[%s245 + $0x10] sm:$0xff]
        %v295 = vld [vmem:[%s245 + $0x18] sm:$0xff]
        %v296 = vld [vmem:[%s245 + $0x20] sm:$0xff]
        %v297 = vld [vmem:[%s245 + $0x28] sm:$0xff]
        %v298 = vld [vmem:[%s245 + $0x30] sm:$0xff]
        %v299 = vld [vmem:[%s245 + $0x38] sm:$0xff]
        %v300 = vpack.c.bf16 %v296, %v292
        %v301 = vpack.c.bf16 %v297, %v293
        %v302 = vpack.c.bf16 %v298, %v294
        %v303 = vpack.c.bf16 %v299, %v295
        %v304 = vld [vmem:[#allocation5] sm:$0xf]
        %v305 = vld [vmem:[#allocation5 + $0x4] sm:$0xf]
        %v306 = vld [vmem:[#allocation5 + $0x8] sm:$0xf]
        %v307 = vld [vmem:[#allocation5 + $0xc] sm:$0xf]
        %v308 = vld [vmem:[#allocation5 + $0x10] sm:$0xf]
        %v309 = vld [vmem:[#allocation5 + $0x14] sm:$0xf]
        %v310 = vld [vmem:[#allocation5 + $0x18] sm:$0xf]
        %v311 = vld [vmem:[#allocation5 + $0x1c] sm:$0xf]
        %v312 = vld [vmem:[#allocation5 + $0x20] sm:$0xf]
        %v313 = vld [vmem:[#allocation5 + $0x24] sm:$0xf]
        %v314 = vld [vmem:[#allocation5 + $0x28] sm:$0xf]
        %v315 = vld [vmem:[#allocation5 + $0x2c] sm:$0xf]
        %v316 = vld [vmem:[#allocation5 + $0x30] sm:$0xf]
        %v317 = vld [vmem:[#allocation5 + $0x34] sm:$0xf]
        %v318 = vld [vmem:[#allocation5 + $0x38] sm:$0xf]
        %v319 = vld [vmem:[#allocation5 + $0x3c] sm:$0xf]
        %v320 = vld [vmem:[#allocation5 + $0x40] sm:$0xf]
        %v321 = vld [vmem:[#allocation5 + $0x44] sm:$0xf]
        %v322 = vld [vmem:[#allocation5 + $0x48] sm:$0xf]
        %v323 = vld [vmem:[#allocation5 + $0x4c] sm:$0xf]
        %v324 = vld [vmem:[#allocation5 + $0x50] sm:$0xf]
        %v325 = vld [vmem:[#allocation5 + $0x54] sm:$0xf]
        %v326 = vld [vmem:[#allocation5 + $0x58] sm:$0xf]
        %v327 = vld [vmem:[#allocation5 + $0x5c] sm:$0xf]
        %v328 = vld [vmem:[#allocation5 + $0x60] sm:$0xf]
        %v329 = vld [vmem:[#allocation5 + $0x64] sm:$0xf]
        %v330 = vld [vmem:[#allocation5 + $0x68] sm:$0xf]
        %v331 = vld [vmem:[#allocation5 + $0x6c] sm:$0xf]
        %v332 = vld [vmem:[#allocation5 + $0x70] sm:$0xf]
        %v333 = vld [vmem:[#allocation5 + $0x74] sm:$0xf]
        %v334 = vld [vmem:[#allocation5 + $0x78] sm:$0xf]
        %v335 = vld [vmem:[#allocation5 + $0x7c] sm:$0xf]
        %v336 = vld [vmem:[#allocation5 + $0x80] sm:$0xf]
        %v337 = vld [vmem:[#allocation5 + $0x84] sm:$0xf]
        %v338 = vld [vmem:[#allocation5 + $0x88] sm:$0xf]
        %v339 = vld [vmem:[#allocation5 + $0x8c] sm:$0xf]
        %v340 = vld [vmem:[#allocation5 + $0x90] sm:$0xf]
        %v341 = vld [vmem:[#allocation5 + $0x94] sm:$0xf]
        %v342 = vld [vmem:[#allocation5 + $0x98] sm:$0xf]
        %v343 = vld [vmem:[#allocation5 + $0x9c] sm:$0xf]
        %v344 = vld [vmem:[#allocation5 + $0xa0] sm:$0xf]
        %v345 = vld [vmem:[#allocation5 + $0xa4] sm:$0xf]
        %v346 = vld [vmem:[#allocation5 + $0xa8] sm:$0xf]
        %v347 = vld [vmem:[#allocation5 + $0xac] sm:$0xf]
        %v348 = vld [vmem:[#allocation5 + $0xb0] sm:$0xf]
        %v349 = vld [vmem:[#allocation5 + $0xb4] sm:$0xf]
        %v350 = vld [vmem:[#allocation5 + $0xb8] sm:$0xf]
        %v351 = vld [vmem:[#allocation5 + $0xbc] sm:$0xf]
        %v352 = vld [vmem:[#allocation5 + $0xc0] sm:$0xf]
        %v353 = vld [vmem:[#allocation5 + $0xc4] sm:$0xf]
        %v354 = vld [vmem:[#allocation5 + $0xc8] sm:$0xf]
        %v355 = vld [vmem:[#allocation5 + $0xcc] sm:$0xf]
        %v356 = vld [vmem:[#allocation5 + $0xd0] sm:$0xf]
        %v357 = vld [vmem:[#allocation5 + $0xd4] sm:$0xf]
        %v358 = vld [vmem:[#allocation5 + $0xd8] sm:$0xf]
        %v359 = vld [vmem:[#allocation5 + $0xdc] sm:$0xf]
        %v360 = vld [vmem:[#allocation5 + $0xe0] sm:$0xf]
        %v361 = vld [vmem:[#allocation5 + $0xe4] sm:$0xf]
        %v362 = vld [vmem:[#allocation5 + $0xe8] sm:$0xf]
        %v363 = vld [vmem:[#allocation5 + $0xec] sm:$0xf]
        %v364 = vld [vmem:[#allocation5 + $0xf0] sm:$0xf]
        %v365 = vld [vmem:[#allocation5 + $0xf4] sm:$0xf]
        %v366 = vld [vmem:[#allocation5 + $0xf8] sm:$0xf]
        %v367 = vld [vmem:[#allocation5 + $0xfc] sm:$0xf]
        %v368 = vld [vmem:[%s2] sm:$0x1]
        %v370 = vlaneseq
        %v371 = vshrl.u32 %v370, 7
        %v372 = vsub.s32 0, %v371
        %v373 = vrot.slane %v368, %v372
        %v439 = vunpack.c.l.b16 %v304
        %v440 = vunpack.c.l.b16 %v305
        %v441 = vunpack.c.l.b16 %v306
        %v442 = vunpack.c.l.b16 %v307
        %v443 = vunpack.c.l.b16 %v308
        %v444 = vunpack.c.l.b16 %v309
        %v445 = vunpack.c.l.b16 %v310
        %v446 = vunpack.c.l.b16 %v311
        %v447 = vunpack.c.l.b16 %v312
        %v448 = vunpack.c.l.b16 %v313
        %v449 = vunpack.c.l.b16 %v314
        %v450 = vunpack.c.l.b16 %v315
        %v451 = vunpack.c.l.b16 %v316
        %v452 = vunpack.c.l.b16 %v317
        %v453 = vunpack.c.l.b16 %v318
        %v454 = vunpack.c.l.b16 %v319
        %v455 = vunpack.c.l.b16 %v320
        %v456 = vunpack.c.l.b16 %v321
        %v457 = vunpack.c.l.b16 %v322
        %v458 = vunpack.c.l.b16 %v323
        %v459 = vunpack.c.l.b16 %v324
        %v460 = vunpack.c.l.b16 %v325
        %v461 = vunpack.c.l.b16 %v326
        %v462 = vunpack.c.l.b16 %v327
        %v463 = vunpack.c.l.b16 %v328
        %v464 = vunpack.c.l.b16 %v329
        %v465 = vunpack.c.l.b16 %v330
        %v466 = vunpack.c.l.b16 %v331
        %v467 = vunpack.c.l.b16 %v332
        %v468 = vunpack.c.l.b16 %v333
        %v469 = vunpack.c.l.b16 %v334
        %v470 = vunpack.c.l.b16 %v335
        %v471 = vunpack.c.l.b16 %v336
        %v472 = vunpack.c.l.b16 %v337
        %v473 = vunpack.c.l.b16 %v338
        %v474 = vunpack.c.l.b16 %v339
        %v475 = vunpack.c.l.b16 %v340
        %v476 = vunpack.c.l.b16 %v341
        %v477 = vunpack.c.l.b16 %v342
        %v478 = vunpack.c.l.b16 %v343
        %v479 = vunpack.c.l.b16 %v344
        %v480 = vunpack.c.l.b16 %v345
        %v481 = vunpack.c.l.b16 %v346
        %v482 = vunpack.c.l.b16 %v347
        %v483 = vunpack.c.l.b16 %v348
        %v484 = vunpack.c.l.b16 %v349
        %v485 = vunpack.c.l.b16 %v350
        %v486 = vunpack.c.l.b16 %v351
        %v487 = vunpack.c.l.b16 %v352
        %v488 = vunpack.c.l.b16 %v353
        %v489 = vunpack.c.l.b16 %v354
        %v490 = vunpack.c.l.b16 %v355
        %v491 = vunpack.c.l.b16 %v356
        %v492 = vunpack.c.l.b16 %v357
        %v493 = vunpack.c.l.b16 %v358
        %v494 = vunpack.c.l.b16 %v359
        %v495 = vunpack.c.l.b16 %v360
        %v496 = vunpack.c.l.b16 %v361
        %v497 = vunpack.c.l.b16 %v362
        %v498 = vunpack.c.l.b16 %v363
        %v499 = vunpack.c.l.b16 %v364
        %v500 = vunpack.c.l.b16 %v365
        %v501 = vunpack.c.l.b16 %v366
        %v502 = vunpack.c.l.b16 %v367
        %v503 = vpack.c.b16 %v440, %v439
        %v504 = vpack.c.b16 %v442, %v441
        %v505 = vpack.c.b16 %v444, %v443
        %v506 = vpack.c.b16 %v446, %v445
        %v507 = vpack.c.b16 %v448, %v447
        %v508 = vpack.c.b16 %v450, %v449
        %v509 = vpack.c.b16 %v452, %v451
        %v510 = vpack.c.b16 %v454, %v453
        %v511 = vpack.c.b16 %v456, %v455
        %v512 = vpack.c.b16 %v458, %v457
        %v513 = vpack.c.b16 %v460, %v459
        %v514 = vpack.c.b16 %v462, %v461
        %v515 = vpack.c.b16 %v464, %v463
        %v516 = vpack.c.b16 %v466, %v465
        %v517 = vpack.c.b16 %v468, %v467
        %v518 = vpack.c.b16 %v470, %v469
        %v519 = vpack.c.b16 %v472, %v471
        %v520 = vpack.c.b16 %v474, %v473
        %v521 = vpack.c.b16 %v476, %v475
        %v522 = vpack.c.b16 %v478, %v477
        %v523 = vpack.c.b16 %v480, %v479
        %v524 = vpack.c.b16 %v482, %v481
        %v525 = vpack.c.b16 %v484, %v483
        %v526 = vpack.c.b16 %v486, %v485
        %v527 = vpack.c.b16 %v488, %v487
        %v528 = vpack.c.b16 %v490, %v489
        %v529 = vpack.c.b16 %v492, %v491
        %v530 = vpack.c.b16 %v494, %v493
        %v531 = vpack.c.b16 %v496, %v495
        %v532 = vpack.c.b16 %v498, %v497
        %v533 = vpack.c.b16 %v500, %v499
        %v534 = vpack.c.b16 %v502, %v501
        %567 = vmatprep.subr.bf16.mxu0 0
        %568 = vmatpush1.bf16.msra.mxu0 %v503
        %569 = vmatprep.subr.bf16.mxu0 0
        %570 = vmatpush1.bf16.msra.mxu0 %v504
        %571 = vmatprep.subr.bf16.mxu0 0
        %572 = vmatpush1.bf16.msra.mxu0 %v505
        %573 = vmatprep.subr.bf16.mxu0 0
        %574 = vmatpush1.bf16.msra.mxu0 %v506
        %575 = vmatprep.subr.bf16.mxu0 0
        %576 = vmatpush1.bf16.msra.mxu0 %v507
        %577 = vmatprep.subr.bf16.mxu0 0
        %578 = vmatpush1.bf16.msra.mxu0 %v508
        %579 = vmatprep.subr.bf16.mxu0 0
        %580 = vmatpush1.bf16.msra.mxu0 %v509
        %581 = vmatprep.subr.bf16.mxu0 0
        %582 = vmatpush1.bf16.msra.mxu0 %v510
        %583 = vmatprep.subr.bf16.mxu0 0
        %584 = vmatpush1.bf16.msra.mxu0 %v511
        %585 = vmatprep.subr.bf16.mxu0 0
        %586 = vmatpush1.bf16.msra.mxu0 %v512
        %587 = vmatprep.subr.bf16.mxu0 0
        %588 = vmatpush1.bf16.msra.mxu0 %v513
        %589 = vmatprep.subr.bf16.mxu0 0
        %590 = vmatpush1.bf16.msra.mxu0 %v514
        %591 = vmatprep.subr.bf16.mxu0 0
        %592 = vmatpush1.bf16.msra.mxu0 %v515
        %593 = vmatprep.subr.bf16.mxu0 0
        %594 = vmatpush1.bf16.msra.mxu0 %v516
        %595 = vmatprep.subr.bf16.mxu0 0
        %596 = vmatpush1.bf16.msra.mxu0 %v517
        %597 = vmatprep.subr.bf16.mxu0 0
        %598 = vmatpush1.bf16.msra.mxu0 %v518
        %599 = vmatprep.mubr.bf16.mxu0 %v301
        %600 = vmatmul.mubr.bf16.gmra.mrb[0].mxu0 %v300
        %v601 = vpop.f32.mrb[0].mxu0
        %v602 = vadd.f32 %v373, %v601
        %v603 = vpop.f32.mrb[0].mxu0
        %v604 = vpop.f32.mrb[0].mxu0
        %v605 = vadd.f32 %v373, %v604
        %v606 = vpop.f32.mrb[0].mxu0
        %607 = vdwg.mxu0
        %608 = vmatprep.subr.bf16.mxu0 0
        %609 = vmatpush1.bf16.msra.mxu0 %v519
        %610 = vmatprep.subr.bf16.mxu0 0
        %611 = vmatpush1.bf16.msra.mxu0 %v520
        %612 = vmatprep.subr.bf16.mxu0 0
        %613 = vmatpush1.bf16.msra.mxu0 %v521
        %614 = vmatprep.subr.bf16.mxu0 0
        %615 = vmatpush1.bf16.msra.mxu0 %v522
        %616 = vmatprep.subr.bf16.mxu0 0
        %617 = vmatpush1.bf16.msra.mxu0 %v523
        %618 = vmatprep.subr.bf16.mxu0 0
        %619 = vmatpush1.bf16.msra.mxu0 %v524
        %620 = vmatprep.subr.bf16.mxu0 0
        %621 = vmatpush1.bf16.msra.mxu0 %v525
        %622 = vmatprep.subr.bf16.mxu0 0
        %623 = vmatpush1.bf16.msra.mxu0 %v526
        %624 = vmatprep.subr.bf16.mxu0 0
        %625 = vmatpush1.bf16.msra.mxu0 %v527
        %626 = vmatprep.subr.bf16.mxu0 0
        %627 = vmatpush1.bf16.msra.mxu0 %v528
        %628 = vmatprep.subr.bf16.mxu0 0
        %629 = vmatpush1.bf16.msra.mxu0 %v529
        %630 = vmatprep.subr.bf16.mxu0 0
        %631 = vmatpush1.bf16.msra.mxu0 %v530
        %632 = vmatprep.subr.bf16.mxu0 0
        %633 = vmatpush1.bf16.msra.mxu0 %v531
        %634 = vmatprep.subr.bf16.mxu0 0
        %635 = vmatpush1.bf16.msra.mxu0 %v532
        %636 = vmatprep.subr.bf16.mxu0 0
        %637 = vmatpush1.bf16.msra.mxu0 %v533
        %638 = vmatprep.subr.bf16.mxu0 0
        %639 = vmatpush1.bf16.msra.mxu0 %v534
        %640 = vmatprep.mubr.bf16.mxu0 %v303
        %641 = vmatmul.mubr.bf16.gmra.mrb[0].mxu0 %v302
        %v642 = vpop.f32.mrb[0].mxu0
        %v643 = vadd.f32 %v602, %v642
        %v644 = vpop.f32.mrb[0].mxu0
        %v645 = vpop.f32.mrb[0].mxu0
        %v646 = vadd.f32 %v605, %v645
        %v647 = vpop.f32.mrb[0].mxu0
        %648 = vdwg.mxu0
        %649 = vadd.xlane.f32.xlu0 %v643
        %v650 = vpop.xlane.xlu0 %649
        %651 = vadd.xlane.f32.xlu0 %v646
        %v652 = vpop.xlane.xlu0 %651
        %v653 = vrcp.pop 128.0
        %v654 = vmul.f32 %v650, %v653
        %v655 = vmul.f32 %v652, %v653
        %v656 = vsub.f32 %v643, %v654
        %v657 = vsub.f32 %v646, %v655
        %v658 = vmul.f32 %v656, %v656
        %v659 = vmul.f32 %v657, %v657
        %660 = vadd.xlane.f32.xlu0 %v658
        %v661 = vpop.xlane.xlu0 %660
        %662 = vadd.xlane.f32.xlu0 %v659
        %v663 = vpop.xlane.xlu0 %662
        %v664 = vmul.f32 %v661, %v653
        %v665 = vmul.f32 %v663, %v653
        %v666 = vadd.f32 %v664, 1e-05
        %v667 = vadd.f32 %v665, 1e-05
        %v668 = vrsqrt.pop %v666
        %v669 = vrsqrt.pop %v667
        %v670 = vmul.f32 %v656, %v668
        %v671 = vmul.f32 %v657, %v669
        %v672 = vmax.f32 %v670, 0.0
        %v673 = vmax.f32 %v671, 0.0
        %v674 = vpack.c.bf16 %v673, %v672
        %v675 = vld [vmem:[#allocation7] sm:$0xf]
        %v676 = vld [vmem:[#allocation7 + $0x4] sm:$0xf]
        %v677 = vld [vmem:[#allocation7 + $0x8] sm:$0xf]
        %v678 = vld [vmem:[#allocation7 + $0xc] sm:$0xf]
        %v679 = vld [vmem:[#allocation7 + $0x10] sm:$0xf]
        %v680 = vld [vmem:[#allocation7 + $0x14] sm:$0xf]
        %v681 = vld [vmem:[#allocation7 + $0x18] sm:$0xf]
        %v682 = vld [vmem:[#allocation7 + $0x1c] sm:$0xf]
        %v683 = vld [vmem:[#allocation7 + $0x20] sm:$0xf]
        %v684 = vld [vmem:[#allocation7 + $0x24] sm:$0xf]
        %v685 = vld [vmem:[#allocation7 + $0x28] sm:$0xf]
        %v686 = vld [vmem:[#allocation7 + $0x2c] sm:$0xf]
        %v687 = vld [vmem:[#allocation7 + $0x30] sm:$0xf]
        %v688 = vld [vmem:[#allocation7 + $0x34] sm:$0xf]
        %v689 = vld [vmem:[#allocation7 + $0x38] sm:$0xf]
        %v690 = vld [vmem:[#allocation7 + $0x3c] sm:$0xf]
        %v691 = vld [vmem:[%s4] sm:$0x1]
        %v693 = vlaneseq
        %v694 = vshrl.u32 %v693, 7
        %v695 = vsub.s32 0, %v694
        %v696 = vrot.slane %v691, %v695
        %v714 = vunpack.c.l.b16 %v675
        %v715 = vunpack.c.l.b16 %v676
        %v716 = vunpack.c.l.b16 %v677
        %v717 = vunpack.c.l.b16 %v678
        %v718 = vunpack.c.l.b16 %v679
        %v719 = vunpack.c.l.b16 %v680
        %v720 = vunpack.c.l.b16 %v681
        %v721 = vunpack.c.l.b16 %v682
        %v722 = vunpack.c.l.b16 %v683
        %v723 = vunpack.c.l.b16 %v684
        %v724 = vunpack.c.l.b16 %v685
        %v725 = vunpack.c.l.b16 %v686
        %v726 = vunpack.c.l.b16 %v687
        %v727 = vunpack.c.l.b16 %v688
        %v728 = vunpack.c.l.b16 %v689
        %v729 = vunpack.c.l.b16 %v690
        %v730 = vpack.c.b16 %v715, %v714
        %v731 = vpack.c.b16 %v717, %v716
        %v732 = vpack.c.b16 %v719, %v718
        %v733 = vpack.c.b16 %v721, %v720
        %v734 = vpack.c.b16 %v723, %v722
        %v735 = vpack.c.b16 %v725, %v724
        %v736 = vpack.c.b16 %v727, %v726
        %v737 = vpack.c.b16 %v729, %v728
        %746 = vmatprep.subr.bf16.mxu0 0
        %747 = vmatpush1.bf16.msra.mxu0 %v730
        %748 = vmatprep.subr.bf16.mxu0 0
        %749 = vmatpush1.bf16.msra.mxu0 %v731
        %750 = vmatprep.subr.bf16.mxu0 0
        %751 = vmatpush1.bf16.msra.mxu0 %v732
        %752 = vmatprep.subr.bf16.mxu0 0
        %753 = vmatpush1.bf16.msra.mxu0 %v733
        %754 = vmatprep.subr.bf16.mxu0 0
        %755 = vmatpush1.bf16.msra.mxu0 %v734
        %756 = vmatprep.subr.bf16.mxu0 0
        %757 = vmatpush1.bf16.msra.mxu0 %v735
        %758 = vmatprep.subr.bf16.mxu0 0
        %759 = vmatpush1.bf16.msra.mxu0 %v736
        %760 = vmatprep.subr.bf16.mxu0 0
        %761 = vmatpush1.bf16.msra.mxu0 %v737
        %762 = vmatprep.subr.bf16.mxu0 0
        %763 = vmatpush1.bf16.msra.mxu0 0
        %764 = vmatprep.subr.bf16.mxu0 0
        %765 = vmatpush1.bf16.msra.mxu0 0
        %766 = vmatprep.subr.bf16.mxu0 0
        %767 = vmatpush1.bf16.msra.mxu0 0
        %768 = vmatprep.subr.bf16.mxu0 0
        %769 = vmatpush1.bf16.msra.mxu0 0
        %770 = vmatprep.subr.bf16.mxu0 0
        %771 = vmatpush1.bf16.msra.mxu0 0
        %772 = vmatprep.subr.bf16.mxu0 0
        %773 = vmatpush1.bf16.msra.mxu0 0
        %774 = vmatprep.subr.bf16.mxu0 0
        %775 = vmatpush1.bf16.msra.mxu0 0
        %776 = vmatprep.subr.bf16.mxu0 0
        %777 = vmatpush1.bf16.msra.mxu0 0
        %778 = vmatprep.mubr.bf16.mxu0 0
        %779 = vmatmul.mubr.bf16.gmra.mrb[0].mxu0 %v674
        %v780 = vpop.f32.mrb[0].mxu0
        %v781 = vadd.f32 %v696, %v780
        %v782 = vpop.f32.mrb[0].mxu0
        %v783 = vpop.f32.mrb[0].mxu0
        %v784 = vadd.f32 %v696, %v783
        %v785 = vpop.f32.mrb[0].mxu0
        %786 = vdwg.mxu0
        %787 = vst [vmem:[%s279] sm:$0xff] %v781
        %788 = vst [vmem:[%s279 + $0x8] sm:$0xff] %v784
        %s789 = sand.u32 %s141, 1
        %s790 = scalar_lea.sflag [#allocation4], %s789
        %s791 = sand.u32 %s141, 1
        %s792 = smul.addr %s791, 16
        %s793 = scalar_lea.vmem [#allocation8], %s792
        // Predicated region
        $region53: #{tpu_custom_call.1} parent=39 // pred_check
          %p794 = pneg %p151
        $region54: #{tpu_custom_call.1} parent=39 // pred_check_branch
          %796 = sbr.rel (%p794) target = $region56
        $region55: #{tpu_custom_call.1} parent=39 // pred_region
          %s797 = smul.u32 2, %s23
          %s798 = ssub.s32 5, %s797
          %p799 = scmp.lt.s32.totalorder %s798, 2
          %s800 = scalar_select %p799, %s798, 2
          %s801 = smul.u32 128, %s800
          %s803 = ssub.s32 256, %s801
          %804 = vsyncadd %s790, %s803
          %p805 = scmp.ne.s32.totalorder 0, %s801
          %s806 = smul.addr %s797, 128
          %s807 = scalar_lea.hbm %s5, %s806
          %s808 = smul.u32 8, %s800
          %s809 = sshll.u32 %s793, 4
          %s810 = int_to_ptr.vmem [resolvable:$true] %s809
          %s811 = sshll.u32 %s808, 4
          %815 = dma.vmem_to_hbm [thread:$0]  (%p805), %s810, %s811, %s807, %s790, 128, 128, 8
        $region56: #{tpu_custom_call.1} parent=39 // pred_fallthru
          _
      $region40: #{tpu_custom_call.1} parent=5 // pred_fallthru
        _
      %p816 = scmp.le.s32.totalorder 2, %s18
      // Predicated region
      $region57: #{tpu_custom_call.1} parent=5 // pred_check
        %p817 = pneg %p816
      $region58: #{tpu_custom_call.1} parent=5 // pred_check_branch
        %819 = sbr.rel (%p817) target = $region60
      $region59: #{tpu_custom_call.1} parent=5 // pred_region
        %s820 = ssub.s32 %s18, 2
        // Predicated region
        $region61: #{tpu_custom_call.1} parent=59 // pred_check
          %p821 = pneg %p157
        $region62: #{tpu_custom_call.1} parent=59 // pred_check_branch
          %823 = sbr.rel (%p821) target = $region64
        $region63: #{tpu_custom_call.1} parent=59 // pred_region
          %s824 = sand.u32 %s142, 1
          %s825 = scalar_lea.sflag [#allocation4], %s824
          %s826 = sand.u32 %s142, 1
          %s827 = smul.addr %s826, 16
          %s828 = scalar_lea.vmem [#allocation8], %s827
          %829 = dma.done %s825, 256
        $region64: #{tpu_custom_call.1} parent=59 // pred_fallthru
          _
      $region60: #{tpu_custom_call.1} parent=5 // pred_fallthru
        _
    $region6: #{tpu_custom_call.1} parent=1 // loop_footer
      %s22 = sadd.s32 1, %s18
    $region7: #{tpu_custom_call.1} parent=1 // loop_footer_branch
      %17 = sbr.rel target = $region3
    $region8: #{tpu_custom_call.1} parent=1 // loop_exit
      _
    %830 = vsyncpa [#allocation3], 1
    %s831 = scalar_lea.sflag [#allocation3], 1
    %832 = vsyncpa %s831, 1
    %833 = vsyncpa [#allocation6], 1
    %834 = vsyncpa [#allocation4], 1
    %s835 = scalar_lea.sflag [#allocation4], 1
    %836 = vsyncpa %s835, 1

</llo_original>
